<compile_context>
chip_gen: v6e
topology: v6e:2x2x1
jax: 0.10.0
libtpu: 0.0.40
codegen_flags: <defaults>
</compile_context>

<pallas_src>
import functools

import jax
import jax.numpy as jnp
from jax.experimental import pallas as pl
from jax.experimental.pallas import tpu as pltpu


# ----------------------------------------------------------------------------
# tiling helpers
# ----------------------------------------------------------------------------
def _round_up(x, m):
    return ((x + m - 1) // m) * m


def _vmem_capacity_bytes():
    """Per-core VMEM capacity; conservative 64 MiB (v7x) if the query fails."""
    try:
        info = pltpu.get_tpu_info()
        cap = getattr(info, "vmem_capacity_bytes", None)
        if cap:
            return int(cap)
    except Exception:
        pass
    return 64 * 1024 * 1024


def _pick_row_tile(R, target, align):
    """Aligned divisor of R, <= target, preferring >= 2 row tiles (megacore)."""
    if R % align != 0:
        return R                       # full-extent block is always legal
    cap = min(target, R)
    if R >= 2 * align:
        cap = min(cap, (R // 2) // align * align)
    t = max(align, (cap // align) * align)
    while t >= align:
        if R % t == 0:
            return t
        t -= align
    return R


def _plan_lane_tiling(S, target):
    """Return (s_blk, S_pad): lane tile (multiple of 128) and padded extent."""
    Sp = _round_up(S, 128)
    if Sp <= target:
        return Sp, Sp
    if S % 128 == 0:
        # largest 128-multiple divisor of S in [512, target] -> no padding
        t = (target // 128) * 128
        while t >= 512:
            if S % t == 0:
                return t, S
            t -= 128
    t = max(128, (target // 128) * 128)
    return t, _round_up(S, t)


# ----------------------------------------------------------------------------
# kernels
# ----------------------------------------------------------------------------
def _stats_kernel(x_ref, psum_ref, pssq_ref):
    """Accumulate 128-lane-wide per-row partial sum / sum-of-squares.

    grid = (row_tiles, s_tiles); axis 1 is the reduction ("arbitrary") axis.
    The cross-lane reduction of the 128 partials happens in the tiny JAX
    finalize step, keeping the inner loop on the VPU-add slot only.
    """
    @pl.when(pl.program_id(1) == 0)
    def _():
        psum_ref[...] = jnp.zeros_like(psum_ref)
        pssq_ref[...] = jnp.zeros_like(pssq_ref)

    ps = psum_ref[...]
    pq = pssq_ref[...]
    n_chunks = x_ref.shape[1] // 128
    for k in range(n_chunks):                 # static unroll; 128-lane chunks
        xk = x_ref[:, k * 128:(k + 1) * 128].astype(jnp.float32)
        ps = ps + xk
        pq = pq + xk * xk
    psum_ref[...] = ps
    pssq_ref[...] = pq


def _apply_kernel(a_ref, b_ref, x_ref, o_ref):
    """out = A[row] * x + B[row] — exactly one broadcast FMA per element."""
    o_ref[...] = (a_ref[...] * x_ref[...] + b_ref[...]).astype(o_ref.dtype)


def _fused_kernel(w_ref, b_ref, x_ref, o_ref, *, inv_cnt_c, inv_cnt_g,
                  eps, bn_eps):
    """Single-pass BCNorm with the whole activation resident in VMEM.

    x_ref: (N, G, Cg, S).  Exact centered moments for both stages.
    """
    x = x_ref[...].astype(jnp.float32)
    # Stage 1: nn.BatchNorm3d (training) — per channel (g, cg) over (N, S).
    mean_c = jnp.sum(jnp.sum(x, axis=3, keepdims=True),
                     axis=0, keepdims=True) * inv_cnt_c            # (1,G,Cg,1)
    xc = x - mean_c
    var_c = jnp.sum(jnp.sum(xc * xc, axis=3, keepdims=True),
                    axis=0, keepdims=True) * inv_cnt_c
    y = xc * jax.lax.rsqrt(var_c + bn_eps)
    # Stage 2: grouped torch.batch_norm — per (n, g) over (Cg, S).
    mean_g = jnp.sum(jnp.sum(y, axis=3, keepdims=True),
                     axis=2, keepdims=True) * inv_cnt_g            # (N,G,1,1)
    yc = y - mean_g
    var_g = jnp.sum(jnp.sum(yc * yc, axis=3, keepdims=True),
                    axis=2, keepdims=True) * inv_cnt_g
    z = yc * jax.lax.rsqrt(var_g + eps)
    o_ref[...] = (w_ref[...] * z + b_ref[...]).astype(o_ref.dtype)


# ----------------------------------------------------------------------------
# forward
# ----------------------------------------------------------------------------
def bcnorm_forward(x_ncdhw, weight_g, bias_g, num_groups, eps=1e-5,
                   bn_eps=1e-5, force_two_pass=False):
    """x_ncdhw: (N, C, D, H, W); weight_g/bias_g: per-group affine (G,)."""
    N, C, D, H, W = x_ncdhw.shape
    G = num_groups
    assert C % G == 0, "num_channels must be divisible by num_groups"
    Cg = C // G
    S = D * H * W
    R = N * C

    itemsize = x_ncdhw.dtype.itemsize
    align = {1: 32, 2: 16}.get(itemsize, 8)        # native sublane packing
    vmem_cap = _vmem_capacity_bytes()
    vmem_limit = min(vmem_cap // 2, 64 * 1024 * 1024)  # 32 MiB v7x / 64 MiB v5e,v6e

    # ---------------- fused single-pass path (x resident in VMEM) -----------
    # Cuts HBM traffic from 3x to 2x.  The 8x factor leaves headroom for the
    # f32 working copies (x, xc, y, yc) plus the in/out blocks.
    slab_f32 = R * S * 4
    if (not force_two_pass) and (8 * slab_f32 <= vmem_limit):
        x4 = x_ncdhw.reshape(N, G, Cg, S)
        w4 = weight_g.astype(jnp.float32).reshape(1, G, 1, 1)
        b4 = bias_g.astype(jnp.float32).reshape(1, G, 1, 1)
        kern = functools.partial(
            _fused_kernel,
            inv_cnt_c=1.0 / float(N * S), inv_cnt_g=1.0 / float(Cg * S),
            eps=float(eps), bn_eps=float(bn_eps))
        out4 = pl.pallas_call(
            kern,
            out_shape=jax.ShapeDtypeStruct((N, G, Cg, S), x_ncdhw.dtype),
            compiler_params=pltpu.CompilerParams(vmem_limit_bytes=vmem_limit),
        )(w4, b4, x4)
        return out4.reshape(N, C, D, H, W)

    # ---------------- two-pass streaming path -------------------------------
    # Row tile: aligned divisor of R, prefer >= 2 tiles so pass 1 shards
    # across both v7x TensorCores (harmless on single-core chips).
    r_blk = _pick_row_tile(R, 256, align)
    # Lane tile sized from the pass-2 footprint:
    #   ~ 2 buffers x (x in + out) x r_blk x s_blk x itemsize <= 0.6 * limit
    budget = int(vmem_limit * 0.6)
    s_cap = max(128, budget // (4 * r_blk * itemsize))
    s_target = max(512, min(8192, (s_cap // 128) * 128))
    s_blk, S_pad = _plan_lane_tiling(S, s_target)
    n_r = R // r_blk
    n_s = S_pad // s_blk
    # Never let the scoped limit clip the chosen blocks (pathological R).
    need = 4 * r_blk * s_blk * itemsize + (8 << 20)
    if need > vmem_limit:
        vmem_limit = min(need, max(vmem_cap - (8 << 20), vmem_limit))

    x2d = x_ncdhw.reshape(R, S)
    if S_pad != S:
        # Zero padding keeps the partial sums exact (counts below use the true
        # S); the padded output tail is sliced away.  Costs one extra copy of
        # x/out, acceptable because real D*H*W is almost always a multiple of
        # 128.  TODO(synk): masked ragged-tail kernels would keep HBM traffic
        # at 3x for awkward shapes.
        x2d = jnp.pad(x2d, ((0, 0), (0, S_pad - S)))

    # ---- pass 1: 128-wide per-row partial sums ----
    psum, pssq = pl.pallas_call(
        _stats_kernel,
        out_shape=(jax.ShapeDtypeStruct((R, 128), jnp.float32),
                   jax.ShapeDtypeStruct((R, 128), jnp.float32)),
        grid=(n_r, n_s),
        in_specs=[pl.BlockSpec((r_blk, s_blk), lambda i, j: (i, j))],
        out_specs=(pl.BlockSpec((r_blk, 128), lambda i, j: (i, 0)),
                   pl.BlockSpec((r_blk, 128), lambda i, j: (i, 0))),
        compiler_params=pltpu.CompilerParams(
            dimension_semantics=("parallel", "arbitrary"),
            vmem_limit_bytes=vmem_limit),
    )(x2d)

    # ---- finalize: tiny O(N*C) scalar math in plain JAX ----
    sum_nc = jnp.sum(psum, axis=1).reshape(N, C)
    ssq_nc = jnp.sum(pssq, axis=1).reshape(N, C)

    # Stage 1: nn.BatchNorm3d (training): per-channel stats over (N, S).
    cnt_c = jnp.float32(N * S)
    mean_c = jnp.sum(sum_nc, axis=0) / cnt_c                          # (C,)
    var_c = jnp.maximum(jnp.sum(ssq_nc, axis=0) / cnt_c - mean_c * mean_c, 0.0)
    a_c = jax.lax.rsqrt(var_c + jnp.float32(bn_eps))
    b_c = -mean_c * a_c                                               # y = a_c*x + b_c

    # Stage 2: torch.batch_norm on view(1, N*G, -1): per-(n, g) stats over
    # (Cg, S) of y, derived analytically from the per-(n, c) partials.
    sum_y = a_c[None, :] * sum_nc + b_c[None, :] * jnp.float32(S)     # (N, C)
    ssq_y = (a_c[None, :] ** 2) * ssq_nc \
        + 2.0 * a_c[None, :] * b_c[None, :] * sum_nc \
        + (b_c[None, :] ** 2) * jnp.float32(S)

    cnt_g = jnp.float32(Cg * S)
    mean_g = jnp.sum(sum_y.reshape(N, G, Cg), axis=2) / cnt_g         # (N, G)
    var_g = jnp.maximum(jnp.sum(ssq_y.reshape(N, G, Cg), axis=2) / cnt_g
                        - mean_g * mean_g, 0.0)
    inv_g = jax.lax.rsqrt(var_g + jnp.float32(eps))                   # (N, G)

    # Fold both normalizations + per-group affine into per-row scale/shift.
    w = weight_g.astype(jnp.float32).reshape(1, G, 1)
    bb = bias_g.astype(jnp.float32).reshape(1, G, 1)
    scale_g = w * inv_g[:, :, None]                                   # (N, G, 1)
    A = (scale_g * a_c.reshape(1, G, Cg)).reshape(R, 1)
    B = (scale_g * (b_c.reshape(1, G, Cg) - mean_g[:, :, None]) + bb).reshape(R, 1)

    # ---- pass 2: fused scale/shift apply ----
    out2d = pl.pallas_call(
        _apply_kernel,
        out_shape=jax.ShapeDtypeStruct((R, S_pad), x_ncdhw.dtype),
        grid=(n_r, n_s),
        in_specs=[pl.BlockSpec((r_blk, 1), lambda i, j: (i, 0)),
                  pl.BlockSpec((r_blk, 1), lambda i, j: (i, 0)),
                  pl.BlockSpec((r_blk, s_blk), lambda i, j: (i, j))],
        out_specs=pl.BlockSpec((r_blk, s_blk), lambda i, j: (i, j)),
        compiler_params=pltpu.CompilerParams(
            dimension_semantics=("parallel", "parallel"),
            vmem_limit_bytes=vmem_limit),
    )(A, B, x2d)

    if S_pad != S:
        out2d = out2d[:, :S]
    return out2d.reshape(N, C, D, H, W)


# ----------------------------------------------------------------------------
# reference + test
# ----------------------------------------------------------------------------
def _bcnorm_reference(x, weight_g, bias_g, num_groups, eps=1e-5, bn_eps=1e-5):
    """Plain-JAX reference mirroring the PyTorch forward (training mode)."""
    N, C, D, H, W = x.shape
    G = num_groups
    x = x.astype(jnp.float32)
    mean_c = jnp.mean(x, axis=(0, 2, 3, 4), keepdims=True)
    var_c = jnp.mean((x - mean_c) ** 2, axis=(0, 2, 3, 4), keepdims=True)
    y = (x - mean_c) / jnp.sqrt(var_c + bn_eps)
    yv = y.reshape(N, G, -1)
    mean_g = jnp.mean(yv, axis=2, keepdims=True)
    var_g = jnp.mean((yv - mean_g) ** 2, axis=2, keepdims=True)
    z = (yv - mean_g) / jnp.sqrt(var_g + eps)
    z = weight_g.reshape(1, G, 1) * z + bias_g.reshape(1, G, 1)
    return z.reshape(N, C, D, H, W)


if __name__ == "__main__":
    key = jax.random.PRNGKey(0)

    # (N, C, D, H, W, G, force_two_pass): exercise the fused single-pass path,
    # the two-pass streaming path (S a multiple of 128), and the padded
    # ragged-S two-pass path.
    configs = [
        (2, 4, 4, 8, 8, 2, False),     # fused (fits in VMEM), S = 256
        (2, 8, 8, 16, 16, 4, True),    # two-pass, S = 2048
        (2, 4, 3, 10, 10, 2, True),    # two-pass, ragged S = 300 -> pad to 384
    ]

    for (N, C, D, H, W, G, force) in configs:
        key, kx = jax.random.split(key)
        x = jax.random.normal(kx, (N, C, D, H, W), dtype=jnp.float32)
        # Deterministic non-trivial per-group affine (module init is ones /
        # zeros; these stand in for trained parameters).
        weight_g = 1.0 + 0.1 * jnp.arange(G, dtype=jnp.float32)
        bias_g = 0.05 * jnp.arange(G, dtype=jnp.float32)

        fwd = jax.jit(functools.partial(
            bcnorm_forward, num_groups=G, eps=1e-5, force_two_pass=force))
        out = jax.block_until_ready(fwd(x, weight_g, bias_g))

        ref = _bcnorm_reference(x, weight_g, bias_g, num_groups=G, eps=1e-5)
        assert out.shape == x.shape
        assert jnp.allclose(out, ref, atol=2e-4, rtol=2e-4), \
            f"mismatch vs reference for config {(N, C, D, H, W, G, force)}"

    print("KERNEL_OK")
</pallas_src>

<mosaic_0001>
module attributes {stable_mosaic.version = 11 : i64} {
  func.func @_fused_kernel(%arg0: memref<1x2x1x1xf32, #tpu.memory_space<vmem>>, %arg1: memref<1x2x1x1xf32, #tpu.memory_space<vmem>>, %arg2: memref<2x2x2x256xf32, #tpu.memory_space<vmem>>, %arg3: memref<2x2x2x256xf32, #tpu.memory_space<vmem>>) attributes {dimension_semantics = [], scalar_prefetch = 0 : i64, scratch_operands = 0 : i64, tpu.core_type = #tpu.core_type<tc>} {
    %c0 = arith.constant 0 : index
    %c0_0 = arith.constant 0 : index
    %c0_1 = arith.constant 0 : index
    %c0_2 = arith.constant 0 : index
    %0 = vector.load %arg2[%c0, %c0_0, %c0_1, %c0_2] : memref<2x2x2x256xf32, #tpu.memory_space<vmem>>, vector<2x2x2x256xf32>
    %cst = arith.constant dense<0.000000e+00> : vector<2x2x2xf32>
    %1 = vector.multi_reduction <add>, %0, %cst [3] : vector<2x2x2x256xf32> to vector<2x2x2xf32>
    %2 = vector.shape_cast %1 : vector<2x2x2xf32> to vector<2x2x2x1xf32>
    %cst_3 = arith.constant dense<0.000000e+00> : vector<2x2x1xf32>
    %3 = vector.multi_reduction <add>, %2, %cst_3 [0] : vector<2x2x2x1xf32> to vector<2x2x1xf32>
    %4 = vector.shape_cast %3 : vector<2x2x1xf32> to vector<1x2x2x1xf32>
    %cst_4 = arith.constant 0.001953125 : f32
    %5 = vector.broadcast %cst_4 : f32 to vector<1x2x2x1xf32>
    %6 = arith.mulf %4, %5 : vector<1x2x2x1xf32>
    %7 = vector.broadcast %6 : vector<1x2x2x1xf32> to vector<2x2x2x256xf32>
    %8 = arith.subf %0, %7 : vector<2x2x2x256xf32>
    %9 = arith.mulf %8, %8 : vector<2x2x2x256xf32>
    %cst_5 = arith.constant dense<0.000000e+00> : vector<2x2x2xf32>
    %10 = vector.multi_reduction <add>, %9, %cst_5 [3] : vector<2x2x2x256xf32> to vector<2x2x2xf32>
    %11 = vector.shape_cast %10 : vector<2x2x2xf32> to vector<2x2x2x1xf32>
    %cst_6 = arith.constant dense<0.000000e+00> : vector<2x2x1xf32>
    %12 = vector.multi_reduction <add>, %11, %cst_6 [0] : vector<2x2x2x1xf32> to vector<2x2x1xf32>
    %13 = vector.shape_cast %12 : vector<2x2x1xf32> to vector<1x2x2x1xf32>
    %cst_7 = arith.constant 0.001953125 : f32
    %14 = vector.broadcast %cst_7 : f32 to vector<1x2x2x1xf32>
    %15 = arith.mulf %13, %14 : vector<1x2x2x1xf32>
    %cst_8 = arith.constant 9.99999974E-6 : f32
    %16 = vector.broadcast %cst_8 : f32 to vector<1x2x2x1xf32>
    %17 = arith.addf %15, %16 : vector<1x2x2x1xf32>
    %18 = math.rsqrt %17 : vector<1x2x2x1xf32>
    %19 = vector.broadcast %18 : vector<1x2x2x1xf32> to vector<2x2x2x256xf32>
    %20 = arith.mulf %8, %19 : vector<2x2x2x256xf32>
    %cst_9 = arith.constant dense<0.000000e+00> : vector<2x2x2xf32>
    %21 = vector.multi_reduction <add>, %20, %cst_9 [3] : vector<2x2x2x256xf32> to vector<2x2x2xf32>
    %22 = vector.shape_cast %21 : vector<2x2x2xf32> to vector<2x2x2x1xf32>
    %cst_10 = arith.constant dense<0.000000e+00> : vector<2x2x1xf32>
    %23 = vector.multi_reduction <add>, %22, %cst_10 [2] : vector<2x2x2x1xf32> to vector<2x2x1xf32>
    %24 = vector.shape_cast %23 : vector<2x2x1xf32> to vector<2x2x1x1xf32>
    %cst_11 = arith.constant 0.001953125 : f32
    %25 = vector.broadcast %cst_11 : f32 to vector<2x2x1x1xf32>
    %26 = arith.mulf %24, %25 : vector<2x2x1x1xf32>
    %27 = vector.broadcast %26 : vector<2x2x1x1xf32> to vector<2x2x2x256xf32>
    %28 = arith.subf %20, %27 : vector<2x2x2x256xf32>
    %29 = arith.mulf %28, %28 : vector<2x2x2x256xf32>
    %cst_12 = arith.constant dense<0.000000e+00> : vector<2x2x2xf32>
    %30 = vector.multi_reduction <add>, %29, %cst_12 [3] : vector<2x2x2x256xf32> to vector<2x2x2xf32>
    %31 = vector.shape_cast %30 : vector<2x2x2xf32> to vector<2x2x2x1xf32>
    %cst_13 = arith.constant dense<0.000000e+00> : vector<2x2x1xf32>
    %32 = vector.multi_reduction <add>, %31, %cst_13 [2] : vector<2x2x2x1xf32> to vector<2x2x1xf32>
    %33 = vector.shape_cast %32 : vector<2x2x1xf32> to vector<2x2x1x1xf32>
    %cst_14 = arith.constant 0.001953125 : f32
    %34 = vector.broadcast %cst_14 : f32 to vector<2x2x1x1xf32>
    %35 = arith.mulf %33, %34 : vector<2x2x1x1xf32>
    %cst_15 = arith.constant 9.99999974E-6 : f32
    %36 = vector.broadcast %cst_15 : f32 to vector<2x2x1x1xf32>
    %37 = arith.addf %35, %36 : vector<2x2x1x1xf32>
    %38 = math.rsqrt %37 : vector<2x2x1x1xf32>
    %39 = vector.broadcast %38 : vector<2x2x1x1xf32> to vector<2x2x2x256xf32>
    %40 = arith.mulf %28, %39 : vector<2x2x2x256xf32>
    %c0_16 = arith.constant 0 : index
    %c0_17 = arith.constant 0 : index
    %c0_18 = arith.constant 0 : index
    %c0_19 = arith.constant 0 : index
    %41 = vector.load %arg0[%c0_16, %c0_17, %c0_18, %c0_19] : memref<1x2x1x1xf32, #tpu.memory_space<vmem>>, vector<1x2x1x1xf32>
    %42 = vector.broadcast %41 : vector<1x2x1x1xf32> to vector<2x2x2x256xf32>
    %43 = arith.mulf %42, %40 : vector<2x2x2x256xf32>
    %c0_20 = arith.constant 0 : index
    %c0_21 = arith.constant 0 : index
    %c0_22 = arith.constant 0 : index
    %c0_23 = arith.constant 0 : index
    %44 = vector.load %arg1[%c0_20, %c0_21, %c0_22, %c0_23] : memref<1x2x1x1xf32, #tpu.memory_space<vmem>>, vector<1x2x1x1xf32>
    %45 = vector.broadcast %44 : vector<1x2x1x1xf32> to vector<2x2x2x256xf32>
    %46 = arith.addf %43, %45 : vector<2x2x2x256xf32>
    %c0_24 = arith.constant 0 : index
    %c0_25 = arith.constant 0 : index
    %c0_26 = arith.constant 0 : index
    %c0_27 = arith.constant 0 : index
    %47 = vector.load %arg3[%c0_24, %c0_25, %c0_26, %c0_27] : memref<2x2x2x256xf32, #tpu.memory_space<vmem>>, vector<2x2x2x256xf32>
    tpu.vector_store %arg3[%c0_24, %c0_25, %c0_26, %c0_27], %46 {strides = array<i32>} : memref<2x2x2x256xf32, #tpu.memory_space<vmem>>, vector<2x2x2x256xf32>,
    return
  }
}

</mosaic_0001>

<llo_original>
// kernel: bcnorm_forward.1
$region0: #{bcnorm_forward.1}
  #allocation0 [shape = 'u32[]', space=smem, size = 0x4, offset = 0x4, fixed_abs, tag = 'smem constant byte address 0x4 - core index']
  #allocation1 [shape = 'u32[144,128]{1,0:T(1,128)}', space=vmem, size = 0x12000, scoped, tag = 'internal scratch']
  %s0 = inlined_call_operand.vmem [shape: f32[1,2,1,1], index: 0, kind: input, shape index: {}]
  %s1 = inlined_call_operand.vmem [shape: f32[1,2,1,1], index: 1, kind: input, shape index: {}]
  %s2 = inlined_call_operand.vmem [shape: f32[2,2,2,256], index: 2, kind: input, shape index: {}]
  %s3 = inlined_call_operand.vmem [shape: f32[2,2,2,256], index: 3, kind: output, shape index: {}]
  %s4 = sld [smem:[#allocation0]]
  $region22: #{bcnorm_forward.1} parent=0
    _
  %s6 = ssub.s32 1, %s4
  %s7 = scalar_select 0, %s6, %s4
  // Predicated region
  $region2: #{bcnorm_forward.1} parent=0 // pred_check
    _
  $region3: #{bcnorm_forward.1} parent=0 // pred_check_branch
    %9 = sbr.rel (0) target = $region5
  $region4: #{bcnorm_forward.1} parent=0 // pred_region
    _
  $region5: #{bcnorm_forward.1} parent=0 // pred_fallthru
    _
  // Predicated region
  $region6: #{bcnorm_forward.1} parent=0 // pred_check
    _
  $region7: #{bcnorm_forward.1} parent=0 // pred_check_branch
    %11 = sbr.rel (0) target = $region9
  $region8: #{bcnorm_forward.1} parent=0 // pred_region
    _
  $region9: #{bcnorm_forward.1} parent=0 // pred_fallthru
    _
  // Predicated region
  $region10: #{bcnorm_forward.1} parent=0 // pred_check
    _
  $region11: #{bcnorm_forward.1} parent=0 // pred_check_branch
    %13 = sbr.rel (0) target = $region13
  $region12: #{bcnorm_forward.1} parent=0 // pred_region
    _
  $region13: #{bcnorm_forward.1} parent=0 // pred_fallthru
    _
  %v14 = vld [vmem:[%s2] sm:$0xf]
  %v15 = vld [vmem:[%s2 + $0x4] sm:$0xf]
  %v16 = vld [vmem:[%s2 + $0x8] sm:$0xf]
  %v17 = vld [vmem:[%s2 + $0xc] sm:$0xf]
  %v23 = vunpack.c.l.s4 1983009808
  %v24 = vunpack.c.0.s8 %v23
  %v25 = vlaneseq
  %v26 = vshrl.u32 %v25, 7
  %v27 = vsub.s32 %v24, %v26
  %v28 = vrot.slane %v14, %v27
  %v29 = vcombine.high %v28, %v28
  %v31 = vunpack.c.l.s4 1983009808
  %v32 = vunpack.c.0.s8 %v31
  %v33 = vlaneseq
  %v34 = vshrl.u32 %v33, 7
  %v35 = vsub.s32 %v32, %v34
  %v36 = vrot.slane %v15, %v35
  %v37 = vcombine.high %v36, %v36
  %v39 = vunpack.c.l.s4 1983009808
  %v40 = vunpack.c.0.s8 %v39
  %v41 = vlaneseq
  %v42 = vshrl.u32 %v41, 7
  %v43 = vsub.s32 %v40, %v42
  %v44 = vrot.slane %v16, %v43
  %v45 = vcombine.high %v44, %v44
  %v47 = vunpack.c.l.s4 1983009808
  %v48 = vunpack.c.0.s8 %v47
  %v49 = vlaneseq
  %v50 = vshrl.u32 %v49, 7
  %v51 = vsub.s32 %v48, %v50
  %v52 = vrot.slane %v17, %v51
  %v53 = vcombine.high %v52, %v52
  %vm62 = vcmask 1041408
  %v63 = vsel %vm62, %v28, 0.0
  %v64 = vsel %vm62, %v29, 0.0
  %v65 = vadd.f32 %v63, %v64
  %66 = vadd.xlane.f32.xlu0 %v65
  %v67 = vpop.xlane.xlu0 %66
  %v68 = vsel %vm62, %v36, 0.0
  %v69 = vsel %vm62, %v37, 0.0
  %v70 = vadd.f32 %v68, %v69
  %71 = vadd.xlane.f32.xlu0 %v70
  %v72 = vpop.xlane.xlu0 %71
  %v73 = vsel %vm62, %v44, 0.0
  %v74 = vsel %vm62, %v45, 0.0
  %v75 = vadd.f32 %v73, %v74
  %76 = vadd.xlane.f32.xlu0 %v75
  %v77 = vpop.xlane.xlu0 %76
  %v78 = vsel %vm62, %v52, 0.0
  %v79 = vsel %vm62, %v53, 0.0
  %v80 = vadd.f32 %v78, %v79
  %81 = vadd.xlane.f32.xlu0 %v80
  %v82 = vpop.xlane.xlu0 %81
  %v83 = vsel %vm62, %v67, 0.0
  %v84 = vsel %vm62, %v77, 0.0
  %v85 = vadd.f32 %v83, %v84
  %v86 = vsel %vm62, %v72, 0.0
  %v87 = vsel %vm62, %v82, 0.0
  %v88 = vadd.f32 %v86, %v87
  %v89 = vmul.f32 %v85, 0.001953125
  %v90 = vmul.f32 %v88, 0.001953125
  %v94 = vunpack.c.l.s4 269488144
  %v95 = vunpack.c.0.s8 %v94
  %v96 = vlaneseq
  %v97 = vshrl.u32 %v96, 7
  %v98 = vsub.s32 %v95, %v97
  %v99 = vrot.slane %v89, %v98
  %v101 = vunpack.c.l.s4 269488144
  %v102 = vunpack.c.0.s8 %v101
  %v103 = vlaneseq
  %v104 = vshrl.u32 %v103, 7
  %v105 = vsub.s32 %v102, %v104
  %v106 = vrot.slane %v90, %v105
  %v109 = vsub.f32 %v14, %v99
  %v110 = vsub.f32 %v15, %v106
  %v111 = vsub.f32 %v16, %v99
  %v112 = vsub.f32 %v17, %v106
  %v113 = vmul.f32 %v109, %v109
  %v114 = vmul.f32 %v110, %v110
  %v115 = vmul.f32 %v111, %v111
  %v116 = vmul.f32 %v112, %v112
  %v122 = vunpack.c.l.s4 1983009808
  %v123 = vunpack.c.0.s8 %v122
  %v124 = vlaneseq
  %v125 = vshrl.u32 %v124, 7
  %v126 = vsub.s32 %v123, %v125
  %v127 = vrot.slane %v113, %v126
  %v128 = vcombine.high %v127, %v127
  %v130 = vunpack.c.l.s4 1983009808
  %v131 = vunpack.c.0.s8 %v130
  %v132 = vlaneseq
  %v133 = vshrl.u32 %v132, 7
  %v134 = vsub.s32 %v131, %v133
  %v135 = vrot.slane %v114, %v134
  %v136 = vcombine.high %v135, %v135
  %v138 = vunpack.c.l.s4 1983009808
  %v139 = vunpack.c.0.s8 %v138
  %v140 = vlaneseq
  %v141 = vshrl.u32 %v140, 7
  %v142 = vsub.s32 %v139, %v141
  %v143 = vrot.slane %v115, %v142
  %v144 = vcombine.high %v143, %v143
  %v146 = vunpack.c.l.s4 1983009808
  %v147 = vunpack.c.0.s8 %v146
  %v148 = vlaneseq
  %v149 = vshrl.u32 %v148, 7
  %v150 = vsub.s32 %v147, %v149
  %v151 = vrot.slane %v116, %v150
  %v152 = vcombine.high %v151, %v151
  %v161 = vsel %vm62, %v127, 0.0
  %v162 = vsel %vm62, %v128, 0.0
  %v163 = vadd.f32 %v161, %v162
  %164 = vadd.xlane.f32.xlu0 %v163
  %v165 = vpop.xlane.xlu0 %164
  %v166 = vsel %vm62, %v135, 0.0
  %v167 = vsel %vm62, %v136, 0.0
  %v168 = vadd.f32 %v166, %v167
  %169 = vadd.xlane.f32.xlu0 %v168
  %v170 = vpop.xlane.xlu0 %169
  %v171 = vsel %vm62, %v143, 0.0
  %v172 = vsel %vm62, %v144, 0.0
  %v173 = vadd.f32 %v171, %v172
  %174 = vadd.xlane.f32.xlu0 %v173
  %v175 = vpop.xlane.xlu0 %174
  %v176 = vsel %vm62, %v151, 0.0
  %v177 = vsel %vm62, %v152, 0.0
  %v178 = vadd.f32 %v176, %v177
  %179 = vadd.xlane.f32.xlu0 %v178
  %v180 = vpop.xlane.xlu0 %179
  %v181 = vsel %vm62, %v165, 0.0
  %v182 = vsel %vm62, %v175, 0.0
  %v183 = vadd.f32 %v181, %v182
  %v184 = vsel %vm62, %v170, 0.0
  %v185 = vsel %vm62, %v180, 0.0
  %v186 = vadd.f32 %v184, %v185
  %v187 = vmul.f32 %v183, 0.001953125
  %v188 = vmul.f32 %v186, 0.001953125
  %v189 = vadd.f32 %v187, 1e-05
  %v190 = vadd.f32 %v188, 1e-05
  %v191 = vrsqrt.pop %v189
  %v192 = vrsqrt.pop %v190
  %v196 = vunpack.c.l.s4 269488144
  %v197 = vunpack.c.0.s8 %v196
  %v198 = vlaneseq
  %v199 = vshrl.u32 %v198, 7
  %v200 = vsub.s32 %v197, %v199
  %v201 = vrot.slane %v191, %v200
  %v203 = vunpack.c.l.s4 269488144
  %v204 = vunpack.c.0.s8 %v203
  %v205 = vlaneseq
  %v206 = vshrl.u32 %v205, 7
  %v207 = vsub.s32 %v204, %v206
  %v208 = vrot.slane %v192, %v207
  %v211 = vmul.f32 %v109, %v201
  %v212 = vmul.f32 %v110, %v208
  %v213 = vmul.f32 %v111, %v201
  %v214 = vmul.f32 %v112, %v208
  %v220 = vunpack.c.l.s4 1983009808
  %v221 = vunpack.c.0.s8 %v220
  %v222 = vlaneseq
  %v223 = vshrl.u32 %v222, 7
  %v224 = vsub.s32 %v221, %v223
  %v225 = vrot.slane %v211, %v224
  %v226 = vcombine.high %v225, %v225
  %v228 = vunpack.c.l.s4 1983009808
  %v229 = vunpack.c.0.s8 %v228
  %v230 = vlaneseq
  %v231 = vshrl.u32 %v230, 7
  %v232 = vsub.s32 %v229, %v231
  %v233 = vrot.slane %v212, %v232
  %v234 = vcombine.high %v233, %v233
  %v236 = vunpack.c.l.s4 1983009808
  %v237 = vunpack.c.0.s8 %v236
  %v238 = vlaneseq
  %v239 = vshrl.u32 %v238, 7
  %v240 = vsub.s32 %v237, %v239
  %v241 = vrot.slane %v213, %v240
  %v242 = vcombine.high %v241, %v241
  %v244 = vunpack.c.l.s4 1983009808
  %v245 = vunpack.c.0.s8 %v244
  %v246 = vlaneseq
  %v247 = vshrl.u32 %v246, 7
  %v248 = vsub.s32 %v245, %v247
  %v249 = vrot.slane %v214, %v248
  %v250 = vcombine.high %v249, %v249
  %v259 = vsel %vm62, %v225, 0.0
  %v260 = vsel %vm62, %v226, 0.0
  %v261 = vadd.f32 %v259, %v260
  %262 = vadd.xlane.f32.xlu0 %v261
  %v263 = vpop.xlane.xlu0 %262
  %v264 = vsel %vm62, %v233, 0.0
  %v265 = vsel %vm62, %v234, 0.0
  %v266 = vadd.f32 %v264, %v265
  %267 = vadd.xlane.f32.xlu0 %v266
  %v268 = vpop.xlane.xlu0 %267
  %v269 = vsel %vm62, %v241, 0.0
  %v270 = vsel %vm62, %v242, 0.0
  %v271 = vadd.f32 %v269, %v270
  %272 = vadd.xlane.f32.xlu0 %v271
  %v273 = vpop.xlane.xlu0 %272
  %v274 = vsel %vm62, %v249, 0.0
  %v275 = vsel %vm62, %v250, 0.0
  %v276 = vadd.f32 %v274, %v275
  %277 = vadd.xlane.f32.xlu0 %v276
  %v278 = vpop.xlane.xlu0 %277
  %v279 = vsel %vm62, %v263, 0.0
  %v280 = vrot.slane %v279, 4
  %v281 = vadd.f32 %v279, %v280
  %v282 = vrot.slane %v281, 2
  %v283 = vadd.f32 %v281, %v282
  %v284 = vrot.slane %v283, 1
  %v285 = vadd.f32 %v283, %v284
  %v286 = vsel %vm62, %v268, 0.0
  %v287 = vrot.slane %v286, 4
  %v288 = vadd.f32 %v286, %v287
  %v289 = vrot.slane %v288, 2
  %v290 = vadd.f32 %v288, %v289
  %v291 = vrot.slane %v290, 1
  %v292 = vadd.f32 %v290, %v291
  %v293 = vsel %vm62, %v273, 0.0
  %v294 = vrot.slane %v293, 4
  %v295 = vadd.f32 %v293, %v294
  %v296 = vrot.slane %v295, 2
  %v297 = vadd.f32 %v295, %v296
  %v298 = vrot.slane %v297, 1
  %v299 = vadd.f32 %v297, %v298
  %v300 = vsel %vm62, %v278, 0.0
  %v301 = vrot.slane %v300, 4
  %v302 = vadd.f32 %v300, %v301
  %v303 = vrot.slane %v302, 2
  %v304 = vadd.f32 %v302, %v303
  %v305 = vrot.slane %v304, 1
  %v306 = vadd.f32 %v304, %v305
  %v307 = vmul.f32 %v285, 0.001953125
  %v308 = vmul.f32 %v292, 0.001953125
  %v309 = vmul.f32 %v299, 0.001953125
  %v310 = vmul.f32 %v306, 0.001953125
  %v311 = vsub.f32 %v211, %v307
  %v312 = vsub.f32 %v212, %v308
  %v313 = vsub.f32 %v213, %v309
  %v314 = vsub.f32 %v214, %v310
  %v315 = vmul.f32 %v311, %v311
  %v316 = vmul.f32 %v312, %v312
  %v317 = vmul.f32 %v313, %v313
  %v318 = vmul.f32 %v314, %v314
  %v324 = vunpack.c.l.s4 1983009808
  %v325 = vunpack.c.0.s8 %v324
  %v326 = vlaneseq
  %v327 = vshrl.u32 %v326, 7
  %v328 = vsub.s32 %v325, %v327
  %v329 = vrot.slane %v315, %v328
  %v330 = vcombine.high %v329, %v329
  %v332 = vunpack.c.l.s4 1983009808
  %v333 = vunpack.c.0.s8 %v332
  %v334 = vlaneseq
  %v335 = vshrl.u32 %v334, 7
  %v336 = vsub.s32 %v333, %v335
  %v337 = vrot.slane %v316, %v336
  %v338 = vcombine.high %v337, %v337
  %v340 = vunpack.c.l.s4 1983009808
  %v341 = vunpack.c.0.s8 %v340
  %v342 = vlaneseq
  %v343 = vshrl.u32 %v342, 7
  %v344 = vsub.s32 %v341, %v343
  %v345 = vrot.slane %v317, %v344
  %v346 = vcombine.high %v345, %v345
  %v348 = vunpack.c.l.s4 1983009808
  %v349 = vunpack.c.0.s8 %v348
  %v350 = vlaneseq
  %v351 = vshrl.u32 %v350, 7
  %v352 = vsub.s32 %v349, %v351
  %v353 = vrot.slane %v318, %v352
  %v354 = vcombine.high %v353, %v353
  %v363 = vsel %vm62, %v329, 0.0
  %v364 = vsel %vm62, %v330, 0.0
  %v365 = vadd.f32 %v363, %v364
  %366 = vadd.xlane.f32.xlu0 %v365
  %v367 = vpop.xlane.xlu0 %366
  %v368 = vsel %vm62, %v337, 0.0
  %v369 = vsel %vm62, %v338, 0.0
  %v370 = vadd.f32 %v368, %v369
  %371 = vadd.xlane.f32.xlu0 %v370
  %v372 = vpop.xlane.xlu0 %371
  %v373 = vsel %vm62, %v345, 0.0
  %v374 = vsel %vm62, %v346, 0.0
  %v375 = vadd.f32 %v373, %v374
  %376 = vadd.xlane.f32.xlu0 %v375
  %v377 = vpop.xlane.xlu0 %376
  %v378 = vsel %vm62, %v353, 0.0
  %v379 = vsel %vm62, %v354, 0.0
  %v380 = vadd.f32 %v378, %v379
  %381 = vadd.xlane.f32.xlu0 %v380
  %v382 = vpop.xlane.xlu0 %381
  %v383 = vsel %vm62, %v367, 0.0
  %v384 = vrot.slane %v383, 4
  %v385 = vadd.f32 %v383, %v384
  %v386 = vrot.slane %v385, 2
  %v387 = vadd.f32 %v385, %v386
  %v388 = vrot.slane %v387, 1
  %v389 = vadd.f32 %v387, %v388
  %v390 = vsel %vm62, %v372, 0.0
  %v391 = vrot.slane %v390, 4
  %v392 = vadd.f32 %v390, %v391
  %v393 = vrot.slane %v392, 2
  %v394 = vadd.f32 %v392, %v393
  %v395 = vrot.slane %v394, 1
  %v396 = vadd.f32 %v394, %v395
  %v397 = vsel %vm62, %v377, 0.0
  %v398 = vrot.slane %v397, 4
  %v399 = vadd.f32 %v397, %v398
  %v400 = vrot.slane %v399, 2
  %v401 = vadd.f32 %v399, %v400
  %v402 = vrot.slane %v401, 1
  %v403 = vadd.f32 %v401, %v402
  %v404 = vsel %vm62, %v382, 0.0
  %v405 = vrot.slane %v404, 4
  %v406 = vadd.f32 %v404, %v405
  %v407 = vrot.slane %v406, 2
  %v408 = vadd.f32 %v406, %v407
  %v409 = vrot.slane %v408, 1
  %v410 = vadd.f32 %v408, %v409
  %v411 = vmul.f32 %v389, 0.001953125
  %v412 = vmul.f32 %v396, 0.001953125
  %v413 = vmul.f32 %v403, 0.001953125
  %v414 = vmul.f32 %v410, 0.001953125
  %v415 = vadd.f32 %v411, 1e-05
  %v416 = vadd.f32 %v412, 1e-05
  %v417 = vadd.f32 %v413, 1e-05
  %v418 = vadd.f32 %v414, 1e-05
  %v419 = vrsqrt.pop %v415
  %v420 = vrsqrt.pop %v416
  %v421 = vrsqrt.pop %v417
  %v422 = vrsqrt.pop %v418
  %v423 = vmul.f32 %v311, %v419
  %v424 = vmul.f32 %v312, %v420
  %v425 = vmul.f32 %v313, %v421
  %v426 = vmul.f32 %v314, %v422
  %v427 = vld [vmem:[%s0] sm:$0x1]
  %v428 = vld [vmem:[%s0 + $0x1] sm:$0x1]
  %v431 = vlaneseq
  %v432 = vshrl.u32 %v431, 7
  %v433 = vsub.s32 0, %v432
  %v434 = vrot.slane %v427, %v433
  %v435 = vlaneseq
  %v436 = vshrl.u32 %v435, 7
  %v437 = vsub.s32 0, %v436
  %v438 = vrot.slane %v428, %v437
  %439 = vset.pattern.permute.xlu0 0
  %440 = vperm.xlu0 %439, %v434
  %v441 = vpop.permute.xlu0 %440
  %443 = vset.pattern.permute.xlu0 0
  %444 = vperm.xlu0 %443, %v438
  %v445 = vpop.permute.xlu0 %444
  %v447 = vmul.f32 %v441, %v423
  %v448 = vmul.f32 %v445, %v424
  %v449 = vmul.f32 %v441, %v425
  %v450 = vmul.f32 %v445, %v426
  %v451 = vld [vmem:[%s1] sm:$0x1]
  %v452 = vld [vmem:[%s1 + $0x1] sm:$0x1]
  %v455 = vlaneseq
  %v456 = vshrl.u32 %v455, 7
  %v457 = vsub.s32 0, %v456
  %v458 = vrot.slane %v451, %v457
  %v459 = vlaneseq
  %v460 = vshrl.u32 %v459, 7
  %v461 = vsub.s32 0, %v460
  %v462 = vrot.slane %v452, %v461
  %463 = vset.pattern.permute.xlu0 0
  %464 = vperm.xlu0 %463, %v458
  %v465 = vpop.permute.xlu0 %464
  %467 = vset.pattern.permute.xlu0 0
  %468 = vperm.xlu0 %467, %v462
  %v469 = vpop.permute.xlu0 %468
  %v471 = vadd.f32 %v447, %v465
  %v472 = vadd.f32 %v448, %v469
  %v473 = vadd.f32 %v449, %v465
  %v474 = vadd.f32 %v450, %v469
  %475 = vst [vmem:[%s3] sm:$0xf] %v471
  %476 = vst [vmem:[%s3 + $0x4] sm:$0xf] %v472
  %477 = vst [vmem:[%s3 + $0x8] sm:$0xf] %v473
  %478 = vst [vmem:[%s3 + $0xc] sm:$0xf] %v474
  // Predicated region
  $region14: #{bcnorm_forward.1} parent=0 // pred_check
    _
  $region15: #{bcnorm_forward.1} parent=0 // pred_check_branch
    %480 = sbr.rel (0) target = $region17
  $region16: #{bcnorm_forward.1} parent=0 // pred_region
    _
  $region17: #{bcnorm_forward.1} parent=0 // pred_fallthru
    _
  // Predicated region
  $region18: #{bcnorm_forward.1} parent=0 // pred_check
    _
  $region19: #{bcnorm_forward.1} parent=0 // pred_check_branch
    %482 = sbr.rel (0) target = $region21
  $region20: #{bcnorm_forward.1} parent=0 // pred_region
    _
  $region21: #{bcnorm_forward.1} parent=0 // pred_fallthru
    _

</llo_original>
